<compile_context>
chip_gen: v7x
topology: tpu7x:2x2x1
jax: 0.10.0
libtpu: 0.0.40
codegen_flags: <defaults>
</compile_context>

<pallas_src>
import jax
import jax.numpy as jnp
from jax.experimental import pallas as pl
from jax.experimental.pallas import tpu as pltpu


def _copy_kernel(x_ref, o_ref):
    # Identity copy through VMEM — the only "compute" a materialized view has.
    o_ref[...] = x_ref[...]


def _resolve_shape(total, shape):
    """Resolve a single -1 entry like torch.Tensor.view does."""
    shape = list(shape)
    neg = [i for i, s in enumerate(shape) if s == -1]
    if len(neg) > 1:
        raise ValueError("only one -1 allowed in view shape")
    if neg:
        known = 1
        for i, s in enumerate(shape):
            if i != neg[0]:
                known *= s
        if total % known != 0:
            raise ValueError(f"cannot view size {total} into shape {shape}")
        shape[neg[0]] = total // known
    prod = 1
    for s in shape:
        prod *= s
    if prod != total:
        raise ValueError(f"cannot view size {total} into shape {shape}")
    return tuple(shape)


def _pick_lane_cols(padded_total, max_cols=4096):
    """Largest multiple of 128 that divides padded_total, capped at max_cols."""
    k = max_cols // 128
    while k >= 1:
        c = k * 128
        if padded_total % c == 0:
            return c
        k -= 1
    return 128  # unreachable: padded_total is a multiple of 128


def _pick_row_tile(rows, cols, itemsize, target_bytes=1 << 20):
    """Rows per block: ~target_bytes per block, multiple of 8, prefer exact divisor."""
    if rows <= 8:
        return rows
    tr = max(8, (target_bytes // (cols * itemsize)) // 8 * 8)
    tr = min(tr, rows)
    # Prefer a tile that evenly divides rows (no masked tail block).
    for cand in range(int(tr), 7, -8):
        if rows % cand == 0:
            return cand
    return int(tr)  # pl.cdiv grid handles the tail block


def _pallas_copy_flat(flat_1d):
    """Identity copy of a flat array via a tiled, lane-dense Pallas kernel."""
    total = flat_1d.shape[0]
    itemsize = jnp.dtype(flat_1d.dtype).itemsize

    # Pad to a multiple of 128 so the lane dim is dense (unmasked vst/vld).
    padded_total = -(-total // 128) * 128
    if padded_total != total:
        padded = jnp.pad(flat_1d, (0, padded_total - total))
    else:
        padded = flat_1d

    cols = _pick_lane_cols(padded_total)
    rows = padded_total // cols
    tr = _pick_row_tile(rows, cols, itemsize)
    grid = (pl.cdiv(rows, tr),)

    slab = padded.reshape(rows, cols)
    copied = pl.pallas_call(
        _copy_kernel,
        out_shape=jax.ShapeDtypeStruct((rows, cols), flat_1d.dtype),
        grid=grid,
        in_specs=[pl.BlockSpec((tr, cols), lambda i: (i, 0))],
        out_specs=pl.BlockSpec((tr, cols), lambda i: (i, 0)),
        compiler_params=pltpu.CompilerParams(
            dimension_semantics=("parallel",),
        ),
        cost_estimate=pl.CostEstimate(
            flops=0,
            transcendentals=0,
            bytes_accessed=2 * padded_total * itemsize,
        ),
    )(slab)

    out = copied.reshape(padded_total)
    if padded_total != total:
        out = out[:total]
    return out


def pallas_view(x, *shape, materialize=False):
    """Equivalent of `input.view(*shape)`.

    Default (materialize=False): metadata-only reshape — zero HBM traffic,
    exactly what a contiguous torch .view() is. Set materialize=True to force
    a fresh buffer via the tiled Pallas copy kernel.
    """
    total = x.size
    out_shape = _resolve_shape(total, shape)
    if not materialize:
        return x.reshape(out_shape)
    flat = x.reshape(total)
    return _pallas_copy_flat(flat).reshape(out_shape)


class View:
    """JAX/Pallas port of the PyTorch View module."""

    def __init__(self, *shape, materialize=False):
        self.shape = shape
        self.materialize = materialize

    def __call__(self, x):
        return pallas_view(x, *self.shape, materialize=self.materialize)


if __name__ == "__main__":
    key = jax.random.PRNGKey(0)
    # NCHW input, small shape consistent with a cDCGAN feature map.
    x = jax.random.normal(key, (2, 4, 16, 16), dtype=jnp.float32)
    ref = x.reshape(2, -1)

    # Default (recommended) path: zero-cost metadata reshape.
    view = View(2, -1)
    y_fast = view(x)
    jax.block_until_ready(y_fast)

    # Kernel path: tiled, lane-dense Pallas copy, then the same metadata glue.
    y_kernel = pallas_view(x, 2, -1, materialize=True)
    jax.block_until_ready(y_kernel)

    assert y_fast.shape == (2, 4 * 16 * 16), y_fast.shape
    assert y_kernel.shape == (2, 4 * 16 * 16), y_kernel.shape
    assert y_fast.dtype == x.dtype and y_kernel.dtype == x.dtype
    assert bool(jnp.array_equal(y_fast, ref))
    assert bool(jnp.array_equal(y_kernel, ref))

    # Exercise the padded (non-multiple-of-128) fallback of the copy kernel.
    x_odd = jax.random.normal(jax.random.PRNGKey(1), (3, 5, 7), dtype=jnp.float32)
    y_odd = pallas_view(x_odd, -1, materialize=True)
    jax.block_until_ready(y_odd)
    assert bool(jnp.array_equal(y_odd, x_odd.reshape(-1)))

    print("KERNEL_OK")
</pallas_src>

<mosaic_0001>
module attributes {stable_mosaic.version = 11 : i64} {
  func.func @_copy_kernel(%arg0: i32, %arg1: memref<1x2048xf32, #tpu.memory_space<vmem>>, %arg2: memref<1x2048xf32, #tpu.memory_space<vmem>>) attributes {dimension_semantics = [#tpu.dimension_semantics<parallel>], iteration_bounds = array<i64: 1>, scalar_prefetch = 0 : i64, scratch_operands = 0 : i64, tpu.core_type = #tpu.core_type<tc>, window_params = [{transform_indices = @transform_0, window_bounds = array<i64: 1, 2048>}, {transform_indices = @transform_1, window_bounds = array<i64: 1, 2048>}]} {
    %c0 = arith.constant 0 : index
    %c0_0 = arith.constant 0 : index
    %0 = vector.load %arg1[%c0, %c0_0] : memref<1x2048xf32, #tpu.memory_space<vmem>>, vector<1x2048xf32>
    %c0_1 = arith.constant 0 : index
    %c0_2 = arith.constant 0 : index
    %1 = vector.load %arg2[%c0_1, %c0_2] : memref<1x2048xf32, #tpu.memory_space<vmem>>, vector<1x2048xf32>
    tpu.vector_store %arg2[%c0_1, %c0_2], %0 {strides = array<i32>} : memref<1x2048xf32, #tpu.memory_space<vmem>>, vector<1x2048xf32>,
    return
  }
  func.func @transform_0(%arg0: i32) -> (i32, i32) {
    %c0_i32 = arith.constant 0 : i32
    %c0_i32_0 = arith.constant 0 : i32
    return %arg0, %c0_i32 : i32, i32
  }
  func.func @transform_1(%arg0: i32) -> (i32, i32) {
    %c0_i32 = arith.constant 0 : i32
    %c0_i32_0 = arith.constant 0 : i32
    return %arg0, %c0_i32 : i32, i32
  }
}

</mosaic_0001>

<llo_original>
// kernel: tpu_custom_call.1
$region0: #{tpu_custom_call.1}
  #allocation0 [shape = 'u32[]', space=smem, size = 0x4, offset = 0x4, fixed_abs, tag = 'smem constant byte address 0x4 - core index']
  #allocation1 [shape = 'u32[144,128]{1,0:T(1,128)}', space=vmem, size = 0x12000, scoped, tag = 'internal scratch']
  %s0 = inlined_call_operand.hbm [shape: f32[1,2048], index: 0, kind: input, shape index: {}]
  %s1 = inlined_call_operand.hbm [shape: f32[1,2048], index: 1, kind: output, shape index: {}]
  %s2 = sld [smem:[#allocation0]]
  $region18: #{tpu_custom_call.1} parent=0
    _
  %s4 = ssub.s32 1, %s2
  %s5 = scalar_select 0, %s4, %s2
  $region1: #{tpu_custom_call.1} parent=0
    #allocation2 [shape = 'u8[8192]{0}', space=vmem, size = 0x2000, scoped, tag = 'input window, operand 0, single buffered']
    #allocation3 [shape = 's32[1]{0}', space=sflag, size = 0x4, scoped, tag = 'scoped memory for tpu_custom_call.1']
    #allocation4 [shape = 's32[1]{0}', space=sflag, size = 0x4, scoped, tag = 'scoped memory for tpu_custom_call.1']
    #allocation5 [shape = 'u8[8192]{0}', space=vmem, size = 0x2000, scoped, tag = 'output window, operand 0, single buffered']
    %6 = vsyncpa [#allocation3], 0
    %7 = vsyncpa [#allocation4], 0
    // Predicated region
    $region2: #{tpu_custom_call.1} parent=1 // pred_check
      _
    $region3: #{tpu_custom_call.1} parent=1 // pred_check_branch
      %9 = sbr.rel (0) target = $region5
    $region4: #{tpu_custom_call.1} parent=1 // pred_region
      %s11 = ssub.s32 256, 256
      %12 = vsyncadd [#allocation3], %s11
      %s14 = sshll.u32 [#allocation2], 4
      %s15 = int_to_ptr.vmem [resolvable:$true] %s14
      %17 = dma.hbm_to_vmem [thread:$0]  %s0, 256, %s15, [#allocation3]
    $region5: #{tpu_custom_call.1} parent=1 // pred_fallthru
      _
    // Predicated region
    $region6: #{tpu_custom_call.1} parent=1 // pred_check
      _
    $region7: #{tpu_custom_call.1} parent=1 // pred_check_branch
      %19 = sbr.rel (0) target = $region9
    $region8: #{tpu_custom_call.1} parent=1 // pred_region
      %20 = dma.done [#allocation3], 256
    $region9: #{tpu_custom_call.1} parent=1 // pred_fallthru
      _
    %v21 = vld [vmem:[#allocation2] sm:$0xff]
    %v22 = vld [vmem:[#allocation2 + $0x8] sm:$0xff]
    %23 = vst [vmem:[#allocation5] sm:$0xff] %v21
    %24 = vst [vmem:[#allocation5 + $0x8] sm:$0xff] %v22
    // Predicated region
    $region10: #{tpu_custom_call.1} parent=1 // pred_check
      _
    $region11: #{tpu_custom_call.1} parent=1 // pred_check_branch
      %26 = sbr.rel (0) target = $region13
    $region12: #{tpu_custom_call.1} parent=1 // pred_region
      %s28 = ssub.s32 256, 256
      %29 = vsyncadd [#allocation4], %s28
      %s31 = sshll.u32 [#allocation5], 4
      %s32 = int_to_ptr.vmem [resolvable:$true] %s31
      %34 = dma.vmem_to_hbm [thread:$0]  %s32, 256, %s1, [#allocation4]
    $region13: #{tpu_custom_call.1} parent=1 // pred_fallthru
      _
    // Predicated region
    $region14: #{tpu_custom_call.1} parent=1 // pred_check
      _
    $region15: #{tpu_custom_call.1} parent=1 // pred_check_branch
      %36 = sbr.rel (0) target = $region17
    $region16: #{tpu_custom_call.1} parent=1 // pred_region
      %37 = dma.done [#allocation4], 256
    $region17: #{tpu_custom_call.1} parent=1 // pred_fallthru
      _
    %38 = vsyncpa [#allocation3], 1
    %39 = vsyncpa [#allocation4], 1

</llo_original>
